<compile_context>
chip_gen: v7x
topology: tpu7x:2x2x1
jax: 0.10.0
libtpu: 0.0.40
codegen_flags: <defaults>
</compile_context>

<pallas_src>
import math

import jax
import jax.numpy as jnp
from jax.experimental import pallas as pl
from jax.experimental.pallas import tpu as pltpu

_PI = math.pi
_INV_PI = 1.0 / math.pi
_EPS = 1e-30
_LANES = 128


# ----------------------------------------------------------------------------
# Shared in-kernel BRDF evaluation (all operands are dense (rows, 128) tiles)
# ----------------------------------------------------------------------------
def _eval_core(wix, wiy, wiz, wox, woy, woz, nx, ny, nz,
               ax, ay, az, rough, metal):
    # half vector h = normalize(wi + wo)
    hx = wix + wox
    hy = wiy + woy
    hz = wiz + woz
    inv_h = jax.lax.rsqrt(hx * hx + hy * hy + hz * hz + 1e-20)
    hx = hx * inv_h
    hy = hy * inv_h
    hz = hz * inv_h

    relu = lambda v: jnp.maximum(v, 0.0)
    NoL = relu(wix * nx + wiy * ny + wiz * nz)
    NoV = relu(wox * nx + woy * ny + woz * nz)
    VoH = relu(wox * hx + woy * hy + woz * hz)
    NoH = relu(nx * hx + ny * hy + nz * hz)

    # GGX normal distribution D
    alpha = rough * rough
    a2 = alpha * alpha
    d = NoH * NoH * (a2 - 1.0) + 1.0
    D = a2 * pl.reciprocal(_PI * d * d + _EPS, approx=True)

    # pdf = 0.5 * D*NoH/(4*max(VoH,1e-4)) + 0.5 * NoL/pi
    pdf_spec = D * NoH * 0.25 * pl.reciprocal(jnp.maximum(VoH, 1e-4), approx=True)
    pdf_diff = NoL * _INV_PI
    pdf = 0.5 * (pdf_spec + pdf_diff)

    # Smith / Schlick-GGX geometry term (k = alpha / 2)
    k = 0.5 * alpha
    one_m_k = 1.0 - k
    G = (NoV * pl.reciprocal(NoV * one_m_k + k + _EPS, approx=True)) * \
        (NoL * pl.reciprocal(NoL * one_m_k + k + _EPS, approx=True))

    # Schlick Fresnel, (1 - VoH)^5 via explicit multiplies (no pow/exp/log)
    m = 1.0 - jnp.minimum(VoH, 1.0)
    m2 = m * m
    m5 = m2 * m2 * m

    one_m_metal = 1.0 - metal
    diff_s = one_m_metal * (NoL * _INV_PI)    # per-lane factor of kd/pi*NoL
    spec_s = D * G * (0.25 * NoL)             # per-lane factor of D*G/4*NoL

    def channel(a):
        ks = 0.04 * one_m_metal + a * metal
        F = ks + (1.0 - ks) * m5
        return a * diff_s + spec_s * F

    return channel(ax), channel(ay), channel(az), pdf


# ----------------------------------------------------------------------------
# Kernels
# ----------------------------------------------------------------------------
def _eval_brdf_kernel(x_ref, o_ref):
    # x_ref: (14, blk, 128)  rows: wi 0-2 | wo 3-5 | rough 6 | metal 7 |
    #                              n 8-10 | albedo 11-13
    x = x_ref[...].astype(jnp.float32)
    br0, br1, br2, pdf = _eval_core(
        x[0], x[1], x[2],          # wi
        x[3], x[4], x[5],          # wo
        x[8], x[9], x[10],         # normal
        x[11], x[12], x[13],       # albedo
        x[6], x[7])                # roughness, metallic
    o_ref[0] = br0.astype(o_ref.dtype)
    o_ref[1] = br1.astype(o_ref.dtype)
    o_ref[2] = br2.astype(o_ref.dtype)
    o_ref[3] = pdf.astype(o_ref.dtype)


def _sample_brdf_kernel(x_ref, o_ref):
    # x_ref: (15, blk, 128)  rows: s1 0 | u0 1 | cos(phi) 2 | sin(phi) 3 |
    #                              wo 4-6 | n 7-9 | rough 10 | metal 11 |
    #                              albedo 12-14
    x = x_ref[...].astype(jnp.float32)
    s1, u0, cp, sp = x[0], x[1], x[2], x[3]
    wox, woy, woz = x[4], x[5], x[6]
    nx, ny, nz = x[7], x[8], x[9]
    rough, metal = x[10], x[11]
    ax, ay, az = x[12], x[13], x[14]

    # ---- per-element tangent frame (t, b, n); up=(0,0,1) or (1,0,0) --------
    use_z = jnp.abs(nz) < 0.999
    upx = jnp.where(use_z, 0.0, 1.0)          # up = (upx, 0, upz)
    upz = jnp.where(use_z, 1.0, 0.0)
    txu = -upz * ny                           # t = normalize(cross(up, n))
    tyu = upz * nx - upx * nz
    tzu = upx * ny
    inv_t = jax.lax.rsqrt(txu * txu + tyu * tyu + tzu * tzu + 1e-20)
    tx = txu * inv_t
    ty = tyu * inv_t
    tz = tzu * inv_t
    bx = ny * tz - nz * ty                    # b = cross(n, t)
    by = nz * tx - nx * tz
    bz = nx * ty - ny * tx

    # ---- diffuse lobe: theta = asin(sqrt(u0)) -> sin/cos without trig ------
    sin_td = jnp.sqrt(u0)
    cos_td = jnp.sqrt(jnp.maximum(1.0 - u0, 0.0))
    lx = sin_td * cp
    ly = sin_td * sp
    lz = cos_td
    dwx = lx * tx + ly * bx + lz * nx
    dwy = lx * ty + ly * by + lz * ny
    dwz = lx * tz + ly * bz + lz * nz

    # ---- GGX lobe: theta = acos(sqrt(t)) -> sin/cos without trig -----------
    alpha = rough * rough
    a2 = alpha * alpha
    tt = (1.0 - u0) * pl.reciprocal(u0 * (a2 - 1.0) + 1.0 + 1e-12, approx=True)
    tt = jnp.clip(tt, 0.0, 1.0)
    cos_ts = jnp.sqrt(tt)
    sin_ts = jnp.sqrt(1.0 - tt)
    lhx = sin_ts * cp
    lhy = sin_ts * sp
    lhz = cos_ts
    whx = lhx * tx + lhy * bx + lhz * nx
    why = lhx * ty + lhy * by + lhz * ny
    whz = lhx * tz + lhy * bz + lhz * nz
    woh2 = 2.0 * (wox * whx + woy * why + woz * whz)
    sxu = woh2 * whx - wox
    syu = woh2 * why - woy
    szu = woh2 * whz - woz
    inv_s = jax.lax.rsqrt(sxu * sxu + syu * syu + szu * szu + 1e-20)
    swx = sxu * inv_s
    swy = syu * inv_s
    swz = szu * inv_s

    # ---- branch select (sample1 > 0.5 -> diffuse) ---------------------------
    take_diff = s1 > 0.5
    wix = jnp.where(take_diff, dwx, swx)
    wiy = jnp.where(take_diff, dwy, swy)
    wiz = jnp.where(take_diff, dwz, swz)

    br0, br1, br2, pdf = _eval_core(wix, wiy, wiz, wox, woy, woz,
                                    nx, ny, nz, ax, ay, az, rough, metal)

    pos = pdf > 0.0
    inv_pdf = pl.reciprocal(jnp.where(pos, pdf, 1.0), approx=True)

    def weight(c):
        w = jnp.where(pos, c * inv_pdf, 0.0)
        return jnp.where(jnp.isnan(w), 0.0, w)

    o_ref[0] = wix.astype(o_ref.dtype)
    o_ref[1] = wiy.astype(o_ref.dtype)
    o_ref[2] = wiz.astype(o_ref.dtype)
    o_ref[3] = pdf.astype(o_ref.dtype)
    o_ref[4] = weight(br0).astype(o_ref.dtype)
    o_ref[5] = weight(br1).astype(o_ref.dtype)
    o_ref[6] = weight(br2).astype(o_ref.dtype)


# ----------------------------------------------------------------------------
# Wrappers (PyTorch (B, C) layout in / out)
# ----------------------------------------------------------------------------
def _grid_geometry(batch, block_rows=None, target_rows=64):
    """Pick sublane-rows per block: up to 64 rows (8192 lanes) per step,
    >= 2 grid steps when there is enough work (feeds both v7x TensorCores)."""
    total_rows = pl.cdiv(batch, _LANES)
    if block_rows is None:
        if total_rows <= 8:
            block_rows = total_rows
        else:
            block_rows = min(target_rows, max(8, (total_rows // 2) // 8 * 8))
    grid = pl.cdiv(total_rows, block_rows)
    rows = grid * block_rows
    return rows, block_rows, grid


def _pack_planes(arrays, rows):
    """Concat (B, c_i) fields along channels, pad batch to rows*128 and
    reshape to a plane-major (C, rows, 128) slab (keeps the caller's dtype)."""
    slab = jnp.concatenate(arrays, axis=1)                 # (B, C)
    B, C = slab.shape
    pad = rows * _LANES - B
    if pad:
        slab = jnp.pad(slab, ((0, pad), (0, 0)))
    return slab.T.reshape(C, rows, _LANES)


def eval_brdf(wi, wo, normal, mat, block_rows=None):
    """Pallas-backed BaseBRDF.eval_brdf.

    Args (PyTorch layout): wi, wo, normal: (B, 3); mat dict with albedo (B, 3),
        roughness (B, 1), metallic (B, 1).
    Returns: brdf (B, 3), pdf (B, 1), float32.
    """
    albedo, roughness, metallic = mat['albedo'], mat['roughness'], mat['metallic']
    B = wi.shape[0]
    rows, blk, grid = _grid_geometry(B, block_rows)

    # single (14, rows, 128) slab: wi 0-2 | wo 3-5 | rough 6 | metal 7 |
    #                              n 8-10 | albedo 11-13
    x = _pack_planes([wi, wo, roughness, metallic, normal, albedo], rows)

    n_elem = rows * _LANES
    cost = pl.CostEstimate(
        flops=90 * n_elem, transcendentals=6 * n_elem,
        bytes_accessed=int(x.size) * x.dtype.itemsize + 4 * n_elem * 4)

    out = pl.pallas_call(
        _eval_brdf_kernel,
        out_shape=jax.ShapeDtypeStruct((4, rows, _LANES), jnp.float32),
        grid=(grid,),
        in_specs=[pl.BlockSpec((14, blk, _LANES), lambda i: (0, i, 0))],
        out_specs=pl.BlockSpec((4, blk, _LANES), lambda i: (0, i, 0)),
        compiler_params=pltpu.CompilerParams(
            dimension_semantics=("parallel",)),
        cost_estimate=cost,
    )(x)

    flat = out.reshape(4, n_elem)
    return flat[0:3, :B].T, flat[3:4, :B].T


def sample_brdf(sample1, sample2, wo, normal, mat, block_rows=None):
    """Pallas-backed BaseBRDF.sample_brdf (samplers + select fused in-kernel).

    Args: sample1 (B,), sample2 (B, 2), wo (B, 3), normal (B, 3), mat dict.
    Returns: wi (B, 3), pdf (B, 1), brdf_weight (B, 3).
    """
    B = sample1.shape[0]
    rows, blk, grid = _grid_geometry(B, block_rows)

    # only cos/sin(phi) need real trig; do them once in the wrapper
    phi = (2.0 * _PI) * sample2[:, 1:2]
    planes = [sample1.reshape(B, 1), sample2[:, 0:1], jnp.cos(phi), jnp.sin(phi),
              wo, normal, mat['roughness'], mat['metallic'], mat['albedo']]
    x = _pack_planes(planes, rows)                         # (15, rows, 128)

    n_elem = rows * _LANES
    cost = pl.CostEstimate(
        flops=220 * n_elem, transcendentals=10 * n_elem,
        bytes_accessed=int(x.size) * x.dtype.itemsize + 7 * n_elem * 4)

    out = pl.pallas_call(
        _sample_brdf_kernel,
        out_shape=jax.ShapeDtypeStruct((7, rows, _LANES), jnp.float32),
        grid=(grid,),
        in_specs=[pl.BlockSpec((15, blk, _LANES), lambda i: (0, i, 0))],
        out_specs=pl.BlockSpec((7, blk, _LANES), lambda i: (0, i, 0)),
        compiler_params=pltpu.CompilerParams(
            dimension_semantics=("parallel",)),
        cost_estimate=cost,
    )(x)

    flat = out.reshape(7, n_elem)
    wi = flat[0:3, :B].T
    pdf = flat[3:4, :B].T
    brdf_weight = flat[4:7, :B].T
    return wi, pdf, brdf_weight


# ----------------------------------------------------------------------------
# Demo
# ----------------------------------------------------------------------------
if __name__ == "__main__":
    B = 256
    key = jax.random.PRNGKey(0)
    k = jax.random.split(key, 8)

    def normalize(v):
        return v / jnp.linalg.norm(v, axis=-1, keepdims=True)

    normal = normalize(jax.random.normal(k[0], (B, 3), jnp.float32))
    wo = normalize(jax.random.normal(k[1], (B, 3), jnp.float32))
    wi = normalize(jax.random.normal(k[2], (B, 3), jnp.float32))
    mat = {
        'albedo': jax.random.uniform(k[3], (B, 3), jnp.float32),
        'roughness': jax.random.uniform(k[4], (B, 1), jnp.float32,
                                        minval=0.05, maxval=1.0),
        'metallic': jax.random.uniform(k[5], (B, 1), jnp.float32),
    }
    sample1 = jax.random.uniform(k[6], (B,), jnp.float32)
    sample2 = jax.random.uniform(k[7], (B, 2), jnp.float32)

    brdf, pdf = eval_brdf(wi, wo, normal, mat)
    jax.block_until_ready((brdf, pdf))
    assert brdf.shape == (B, 3) and pdf.shape == (B, 1)
    assert bool(jnp.all(jnp.isfinite(brdf))) and bool(jnp.all(jnp.isfinite(pdf)))

    wi_s, pdf_s, w_s = sample_brdf(sample1, sample2, wo, normal, mat)
    jax.block_until_ready((wi_s, pdf_s, w_s))
    assert wi_s.shape == (B, 3) and pdf_s.shape == (B, 1) and w_s.shape == (B, 3)
    assert bool(jnp.all(jnp.isfinite(wi_s))) and bool(jnp.all(jnp.isfinite(w_s)))

    print("KERNEL_OK")
</pallas_src>

<mosaic_0001>
module attributes {stable_mosaic.version = 11 : i64} {
  func.func @_eval_brdf_kernel(%arg0: i32, %arg1: memref<14x2x128xf32, #tpu.memory_space<vmem>>, %arg2: memref<4x2x128xf32, #tpu.memory_space<vmem>>) attributes {dimension_semantics = [#tpu.dimension_semantics<parallel>], iteration_bounds = array<i64: 1>, scalar_prefetch = 0 : i64, scratch_operands = 0 : i64, tpu.core_type = #tpu.core_type<tc>, window_params = [{transform_indices = @transform_0, window_bounds = array<i64: 14, 2, 128>}, {transform_indices = @transform_1, window_bounds = array<i64: 4, 2, 128>}]} {
    %c0 = arith.constant 0 : index
    %c0_0 = arith.constant 0 : index
    %c0_1 = arith.constant 0 : index
    %0 = vector.load %arg1[%c0, %c0_0, %c0_1] : memref<14x2x128xf32, #tpu.memory_space<vmem>>, vector<14x2x128xf32>
    %1 = vector.extract_strided_slice %0 {offsets = [0, 0, 0], sizes = [1, 2, 128], strides = [1, 1, 1]} : vector<14x2x128xf32> to vector<1x2x128xf32>
    %2 = vector.shape_cast %1 : vector<1x2x128xf32> to vector<2x128xf32>
    %3 = vector.extract_strided_slice %0 {offsets = [1, 0, 0], sizes = [1, 2, 128], strides = [1, 1, 1]} : vector<14x2x128xf32> to vector<1x2x128xf32>
    %4 = vector.shape_cast %3 : vector<1x2x128xf32> to vector<2x128xf32>
    %5 = vector.extract_strided_slice %0 {offsets = [2, 0, 0], sizes = [1, 2, 128], strides = [1, 1, 1]} : vector<14x2x128xf32> to vector<1x2x128xf32>
    %6 = vector.shape_cast %5 : vector<1x2x128xf32> to vector<2x128xf32>
    %7 = vector.extract_strided_slice %0 {offsets = [3, 0, 0], sizes = [1, 2, 128], strides = [1, 1, 1]} : vector<14x2x128xf32> to vector<1x2x128xf32>
    %8 = vector.shape_cast %7 : vector<1x2x128xf32> to vector<2x128xf32>
    %9 = vector.extract_strided_slice %0 {offsets = [4, 0, 0], sizes = [1, 2, 128], strides = [1, 1, 1]} : vector<14x2x128xf32> to vector<1x2x128xf32>
    %10 = vector.shape_cast %9 : vector<1x2x128xf32> to vector<2x128xf32>
    %11 = vector.extract_strided_slice %0 {offsets = [5, 0, 0], sizes = [1, 2, 128], strides = [1, 1, 1]} : vector<14x2x128xf32> to vector<1x2x128xf32>
    %12 = vector.shape_cast %11 : vector<1x2x128xf32> to vector<2x128xf32>
    %13 = vector.extract_strided_slice %0 {offsets = [8, 0, 0], sizes = [1, 2, 128], strides = [1, 1, 1]} : vector<14x2x128xf32> to vector<1x2x128xf32>
    %14 = vector.shape_cast %13 : vector<1x2x128xf32> to vector<2x128xf32>
    %15 = vector.extract_strided_slice %0 {offsets = [9, 0, 0], sizes = [1, 2, 128], strides = [1, 1, 1]} : vector<14x2x128xf32> to vector<1x2x128xf32>
    %16 = vector.shape_cast %15 : vector<1x2x128xf32> to vector<2x128xf32>
    %17 = vector.extract_strided_slice %0 {offsets = [10, 0, 0], sizes = [1, 2, 128], strides = [1, 1, 1]} : vector<14x2x128xf32> to vector<1x2x128xf32>
    %18 = vector.shape_cast %17 : vector<1x2x128xf32> to vector<2x128xf32>
    %19 = vector.extract_strided_slice %0 {offsets = [11, 0, 0], sizes = [1, 2, 128], strides = [1, 1, 1]} : vector<14x2x128xf32> to vector<1x2x128xf32>
    %20 = vector.shape_cast %19 : vector<1x2x128xf32> to vector<2x128xf32>
    %21 = vector.extract_strided_slice %0 {offsets = [12, 0, 0], sizes = [1, 2, 128], strides = [1, 1, 1]} : vector<14x2x128xf32> to vector<1x2x128xf32>
    %22 = vector.shape_cast %21 : vector<1x2x128xf32> to vector<2x128xf32>
    %23 = vector.extract_strided_slice %0 {offsets = [13, 0, 0], sizes = [1, 2, 128], strides = [1, 1, 1]} : vector<14x2x128xf32> to vector<1x2x128xf32>
    %24 = vector.shape_cast %23 : vector<1x2x128xf32> to vector<2x128xf32>
    %25 = vector.extract_strided_slice %0 {offsets = [6, 0, 0], sizes = [1, 2, 128], strides = [1, 1, 1]} : vector<14x2x128xf32> to vector<1x2x128xf32>
    %26 = vector.shape_cast %25 : vector<1x2x128xf32> to vector<2x128xf32>
    %27 = vector.extract_strided_slice %0 {offsets = [7, 0, 0], sizes = [1, 2, 128], strides = [1, 1, 1]} : vector<14x2x128xf32> to vector<1x2x128xf32>
    %28 = vector.shape_cast %27 : vector<1x2x128xf32> to vector<2x128xf32>
    %29 = arith.addf %2, %8 : vector<2x128xf32>
    %30 = arith.addf %4, %10 : vector<2x128xf32>
    %31 = arith.addf %6, %12 : vector<2x128xf32>
    %32 = arith.mulf %29, %29 : vector<2x128xf32>
    %33 = arith.mulf %30, %30 : vector<2x128xf32>
    %34 = arith.addf %32, %33 : vector<2x128xf32>
    %35 = arith.mulf %31, %31 : vector<2x128xf32>
    %36 = arith.addf %34, %35 : vector<2x128xf32>
    %cst = arith.constant 9.99999968E-21 : f32
    %37 = vector.broadcast %cst : f32 to vector<2x128xf32>
    %38 = arith.addf %36, %37 : vector<2x128xf32>
    %39 = math.rsqrt %38 : vector<2x128xf32>
    %40 = arith.mulf %29, %39 : vector<2x128xf32>
    %41 = arith.mulf %30, %39 : vector<2x128xf32>
    %42 = arith.mulf %31, %39 : vector<2x128xf32>
    %43 = arith.mulf %2, %14 : vector<2x128xf32>
    %44 = arith.mulf %4, %16 : vector<2x128xf32>
    %45 = arith.addf %43, %44 : vector<2x128xf32>
    %46 = arith.mulf %6, %18 : vector<2x128xf32>
    %47 = arith.addf %45, %46 : vector<2x128xf32>
    %cst_2 = arith.constant 0.000000e+00 : f32
    %48 = vector.broadcast %cst_2 : f32 to vector<2x128xf32>
    %49 = arith.maximumf %47, %48 : vector<2x128xf32>
    %50 = arith.mulf %8, %14 : vector<2x128xf32>
    %51 = arith.mulf %10, %16 : vector<2x128xf32>
    %52 = arith.addf %50, %51 : vector<2x128xf32>
    %53 = arith.mulf %12, %18 : vector<2x128xf32>
    %54 = arith.addf %52, %53 : vector<2x128xf32>
    %cst_3 = arith.constant 0.000000e+00 : f32
    %55 = vector.broadcast %cst_3 : f32 to vector<2x128xf32>
    %56 = arith.maximumf %54, %55 : vector<2x128xf32>
    %57 = arith.mulf %8, %40 : vector<2x128xf32>
    %58 = arith.mulf %10, %41 : vector<2x128xf32>
    %59 = arith.addf %57, %58 : vector<2x128xf32>
    %60 = arith.mulf %12, %42 : vector<2x128xf32>
    %61 = arith.addf %59, %60 : vector<2x128xf32>
    %cst_4 = arith.constant 0.000000e+00 : f32
    %62 = vector.broadcast %cst_4 : f32 to vector<2x128xf32>
    %63 = arith.maximumf %61, %62 : vector<2x128xf32>
    %64 = arith.mulf %14, %40 : vector<2x128xf32>
    %65 = arith.mulf %16, %41 : vector<2x128xf32>
    %66 = arith.addf %64, %65 : vector<2x128xf32>
    %67 = arith.mulf %18, %42 : vector<2x128xf32>
    %68 = arith.addf %66, %67 : vector<2x128xf32>
    %cst_5 = arith.constant 0.000000e+00 : f32
    %69 = vector.broadcast %cst_5 : f32 to vector<2x128xf32>
    %70 = arith.maximumf %68, %69 : vector<2x128xf32>
    %71 = arith.mulf %26, %26 : vector<2x128xf32>
    %72 = arith.mulf %71, %71 : vector<2x128xf32>
    %73 = arith.mulf %70, %70 : vector<2x128xf32>
    %cst_6 = arith.constant 1.000000e+00 : f32
    %74 = vector.broadcast %cst_6 : f32 to vector<2x128xf32>
    %75 = arith.subf %72, %74 : vector<2x128xf32>
    %76 = arith.mulf %73, %75 : vector<2x128xf32>
    %cst_7 = arith.constant 1.000000e+00 : f32
    %77 = vector.broadcast %cst_7 : f32 to vector<2x128xf32>
    %78 = arith.addf %76, %77 : vector<2x128xf32>
    %cst_8 = arith.constant 3.14159274 : f32
    %79 = vector.broadcast %cst_8 : f32 to vector<2x128xf32>
    %80 = arith.mulf %79, %78 : vector<2x128xf32>
    %81 = arith.mulf %80, %78 : vector<2x128xf32>
    %cst_9 = arith.constant 1.000000e-30 : f32
    %82 = vector.broadcast %cst_9 : f32 to vector<2x128xf32>
    %83 = arith.addf %81, %82 : vector<2x128xf32>
    %84 = tpu.reciprocal %83 {approx = true} : vector<2x128xf32> -> vector<2x128xf32>
    %85 = arith.mulf %72, %84 : vector<2x128xf32>
    %86 = arith.mulf %85, %70 : vector<2x128xf32>
    %cst_10 = arith.constant 2.500000e-01 : f32
    %87 = vector.broadcast %cst_10 : f32 to vector<2x128xf32>
    %88 = arith.mulf %86, %87 : vector<2x128xf32>
    %cst_11 = arith.constant 9.99999974E-5 : f32
    %89 = vector.broadcast %cst_11 : f32 to vector<2x128xf32>
    %90 = arith.maximumf %63, %89 : vector<2x128xf32>
    %91 = tpu.reciprocal %90 {approx = true} : vector<2x128xf32> -> vector<2x128xf32>
    %92 = arith.mulf %88, %91 : vector<2x128xf32>
    %cst_12 = arith.constant 0.318309873 : f32
    %93 = vector.broadcast %cst_12 : f32 to vector<2x128xf32>
    %94 = arith.mulf %49, %93 : vector<2x128xf32>
    %95 = arith.addf %92, %94 : vector<2x128xf32>
    %cst_13 = arith.constant 5.000000e-01 : f32
    %96 = vector.broadcast %cst_13 : f32 to vector<2x128xf32>
    %97 = arith.mulf %96, %95 : vector<2x128xf32>
    %cst_14 = arith.constant 5.000000e-01 : f32
    %98 = vector.broadcast %cst_14 : f32 to vector<2x128xf32>
    %99 = arith.mulf %98, %71 : vector<2x128xf32>
    %cst_15 = arith.constant 1.000000e+00 : f32
    %100 = vector.broadcast %cst_15 : f32 to vector<2x128xf32>
    %101 = arith.subf %100, %99 : vector<2x128xf32>
    %102 = arith.mulf %56, %101 : vector<2x128xf32>
    %103 = arith.addf %102, %99 : vector<2x128xf32>
    %cst_16 = arith.constant 1.000000e-30 : f32
    %104 = vector.broadcast %cst_16 : f32 to vector<2x128xf32>
    %105 = arith.addf %103, %104 : vector<2x128xf32>
    %106 = tpu.reciprocal %105 {approx = true} : vector<2x128xf32> -> vector<2x128xf32>
    %107 = arith.mulf %56, %106 : vector<2x128xf32>
    %108 = arith.mulf %49, %101 : vector<2x128xf32>
    %109 = arith.addf %108, %99 : vector<2x128xf32>
    %cst_17 = arith.constant 1.000000e-30 : f32
    %110 = vector.broadcast %cst_17 : f32 to vector<2x128xf32>
    %111 = arith.addf %109, %110 : vector<2x128xf32>
    %112 = tpu.reciprocal %111 {approx = true} : vector<2x128xf32> -> vector<2x128xf32>
    %113 = arith.mulf %49, %112 : vector<2x128xf32>
    %114 = arith.mulf %107, %113 : vector<2x128xf32>
    %cst_18 = arith.constant 1.000000e+00 : f32
    %115 = vector.broadcast %cst_18 : f32 to vector<2x128xf32>
    %116 = arith.minimumf %63, %115 : vector<2x128xf32>
    %cst_19 = arith.constant 1.000000e+00 : f32
    %117 = vector.broadcast %cst_19 : f32 to vector<2x128xf32>
    %118 = arith.subf %117, %116 : vector<2x128xf32>
    %119 = arith.mulf %118, %118 : vector<2x128xf32>
    %120 = arith.mulf %119, %119 : vector<2x128xf32>
    %121 = arith.mulf %120, %118 : vector<2x128xf32>
    %cst_20 = arith.constant 1.000000e+00 : f32
    %122 = vector.broadcast %cst_20 : f32 to vector<2x128xf32>
    %123 = arith.subf %122, %28 : vector<2x128xf32>
    %cst_21 = arith.constant 0.318309873 : f32
    %124 = vector.broadcast %cst_21 : f32 to vector<2x128xf32>
    %125 = arith.mulf %49, %124 : vector<2x128xf32>
    %126 = arith.mulf %123, %125 : vector<2x128xf32>
    %127 = arith.mulf %85, %114 : vector<2x128xf32>
    %cst_22 = arith.constant 2.500000e-01 : f32
    %128 = vector.broadcast %cst_22 : f32 to vector<2x128xf32>
    %129 = arith.mulf %128, %49 : vector<2x128xf32>
    %130 = arith.mulf %127, %129 : vector<2x128xf32>
    %cst_23 = arith.constant 4.000000e-02 : f32
    %131 = vector.broadcast %cst_23 : f32 to vector<2x128xf32>
    %132 = arith.mulf %131, %123 : vector<2x128xf32>
    %133 = arith.mulf %20, %28 : vector<2x128xf32>
    %134 = arith.addf %132, %133 : vector<2x128xf32>
    %cst_24 = arith.constant 1.000000e+00 : f32
    %135 = vector.broadcast %cst_24 : f32 to vector<2x128xf32>
    %136 = arith.subf %135, %134 : vector<2x128xf32>
    %137 = arith.mulf %136, %121 : vector<2x128xf32>
    %138 = arith.addf %134, %137 : vector<2x128xf32>
    %139 = arith.mulf %20, %126 : vector<2x128xf32>
    %140 = arith.mulf %130, %138 : vector<2x128xf32>
    %141 = arith.addf %139, %140 : vector<2x128xf32>
    %cst_25 = arith.constant 4.000000e-02 : f32
    %142 = vector.broadcast %cst_25 : f32 to vector<2x128xf32>
    %143 = arith.mulf %142, %123 : vector<2x128xf32>
    %144 = arith.mulf %22, %28 : vector<2x128xf32>
    %145 = arith.addf %143, %144 : vector<2x128xf32>
    %cst_26 = arith.constant 1.000000e+00 : f32
    %146 = vector.broadcast %cst_26 : f32 to vector<2x128xf32>
    %147 = arith.subf %146, %145 : vector<2x128xf32>
    %148 = arith.mulf %147, %121 : vector<2x128xf32>
    %149 = arith.addf %145, %148 : vector<2x128xf32>
    %150 = arith.mulf %22, %126 : vector<2x128xf32>
    %151 = arith.mulf %130, %149 : vector<2x128xf32>
    %152 = arith.addf %150, %151 : vector<2x128xf32>
    %cst_27 = arith.constant 4.000000e-02 : f32
    %153 = vector.broadcast %cst_27 : f32 to vector<2x128xf32>
    %154 = arith.mulf %153, %123 : vector<2x128xf32>
    %155 = arith.mulf %24, %28 : vector<2x128xf32>
    %156 = arith.addf %154, %155 : vector<2x128xf32>
    %cst_28 = arith.constant 1.000000e+00 : f32
    %157 = vector.broadcast %cst_28 : f32 to vector<2x128xf32>
    %158 = arith.subf %157, %156 : vector<2x128xf32>
    %159 = arith.mulf %158, %121 : vector<2x128xf32>
    %160 = arith.addf %156, %159 : vector<2x128xf32>
    %161 = arith.mulf %24, %126 : vector<2x128xf32>
    %162 = arith.mulf %130, %160 : vector<2x128xf32>
    %163 = arith.addf %161, %162 : vector<2x128xf32>
    %c0_29 = arith.constant 0 : index
    %c0_30 = arith.constant 0 : index
    %c0_31 = arith.constant 0 : index
    %164 = vector.load %arg2[%c0_29, %c0_30, %c0_31] : memref<4x2x128xf32, #tpu.memory_space<vmem>>, vector<1x2x128xf32>
    %165 = vector.shape_cast %164 : vector<1x2x128xf32> to vector<2x128xf32>
    %166 = vector.shape_cast %141 : vector<2x128xf32> to vector<1x2x128xf32>
    tpu.vector_store %arg2[%c0_29, %c0_30, %c0_31], %166 {strides = array<i32>} : memref<4x2x128xf32, #tpu.memory_space<vmem>>, vector<1x2x128xf32>,
    %c1 = arith.constant 1 : index
    %c0_32 = arith.constant 0 : index
    %c0_33 = arith.constant 0 : index
    %167 = vector.load %arg2[%c1, %c0_32, %c0_33] : memref<4x2x128xf32, #tpu.memory_space<vmem>>, vector<1x2x128xf32>
    %168 = vector.shape_cast %167 : vector<1x2x128xf32> to vector<2x128xf32>
    %169 = vector.shape_cast %152 : vector<2x128xf32> to vector<1x2x128xf32>
    tpu.vector_store %arg2[%c1, %c0_32, %c0_33], %169 {strides = array<i32>} : memref<4x2x128xf32, #tpu.memory_space<vmem>>, vector<1x2x128xf32>,
    %c2 = arith.constant 2 : index
    %c0_34 = arith.constant 0 : index
    %c0_35 = arith.constant 0 : index
    %170 = vector.load %arg2[%c2, %c0_34, %c0_35] : memref<4x2x128xf32, #tpu.memory_space<vmem>>, vector<1x2x128xf32>
    %171 = vector.shape_cast %170 : vector<1x2x128xf32> to vector<2x128xf32>
    %172 = vector.shape_cast %163 : vector<2x128xf32> to vector<1x2x128xf32>
    tpu.vector_store %arg2[%c2, %c0_34, %c0_35], %172 {strides = array<i32>} : memref<4x2x128xf32, #tpu.memory_space<vmem>>, vector<1x2x128xf32>,
    %c3 = arith.constant 3 : index
    %c0_36 = arith.constant 0 : index
    %c0_37 = arith.constant 0 : index
    %173 = vector.load %arg2[%c3, %c0_36, %c0_37] : memref<4x2x128xf32, #tpu.memory_space<vmem>>, vector<1x2x128xf32>
    %174 = vector.shape_cast %173 : vector<1x2x128xf32> to vector<2x128xf32>
    %175 = vector.shape_cast %97 : vector<2x128xf32> to vector<1x2x128xf32>
    tpu.vector_store %arg2[%c3, %c0_36, %c0_37], %175 {strides = array<i32>} : memref<4x2x128xf32, #tpu.memory_space<vmem>>, vector<1x2x128xf32>,
    return
  }
  func.func @transform_0(%arg0: i32) -> (i32, i32, i32) {
    %c0_i32 = arith.constant 0 : i32
    %c0_i32_0 = arith.constant 0 : i32
    %c0_i32_1 = arith.constant 0 : i32
    return %c0_i32, %arg0, %c0_i32_0 : i32, i32, i32
  }
  func.func @transform_1(%arg0: i32) -> (i32, i32, i32) {
    %c0_i32 = arith.constant 0 : i32
    %c0_i32_0 = arith.constant 0 : i32
    %c0_i32_1 = arith.constant 0 : i32
    return %c0_i32, %arg0, %c0_i32_0 : i32, i32, i32
  }
}

</mosaic_0001>

<llo_original>
// kernel: tpu_custom_call.1
$region0: #{tpu_custom_call.1}
  #allocation0 [shape = 'u32[]', space=smem, size = 0x4, offset = 0x4, fixed_abs, tag = 'smem constant byte address 0x4 - core index']
  #allocation1 [shape = 'u32[144,128]{1,0:T(1,128)}', space=vmem, size = 0x12000, scoped, tag = 'internal scratch']
  %s0 = inlined_call_operand.hbm [shape: f32[14,2,128], index: 0, kind: input, shape index: {}]
  %s1 = inlined_call_operand.hbm [shape: f32[4,2,128], index: 1, kind: output, shape index: {}]
  %s2 = sld [smem:[#allocation0]]
  $region18: #{tpu_custom_call.1} parent=0
    _
  %s4 = ssub.s32 1, %s2
  %s5 = scalar_select 0, %s4, %s2
  $region1: #{tpu_custom_call.1} parent=0
    #allocation2 [shape = 'u8[14336]{0}', space=vmem, size = 0x3800, scoped, tag = 'input window, operand 0, single buffered']
    #allocation3 [shape = 's32[1]{0}', space=sflag, size = 0x4, scoped, tag = 'scoped memory for tpu_custom_call.1']
    #allocation4 [shape = 's32[1]{0}', space=sflag, size = 0x4, scoped, tag = 'scoped memory for tpu_custom_call.1']
    #allocation5 [shape = 'u8[4096]{0}', space=vmem, size = 0x1000, scoped, tag = 'output window, operand 0, single buffered']
    %6 = vsyncpa [#allocation3], 0
    %7 = vsyncpa [#allocation4], 0
    // Predicated region
    $region2: #{tpu_custom_call.1} parent=1 // pred_check
      _
    $region3: #{tpu_custom_call.1} parent=1 // pred_check_branch
      %9 = sbr.rel (0) target = $region5
    $region4: #{tpu_custom_call.1} parent=1 // pred_region
      %s11 = ssub.s32 448, 448
      %12 = vsyncadd [#allocation3], %s11
      %s13 = sshll.u32 [#allocation2], 4
      %s14 = int_to_ptr.vmem [resolvable:$true] %s13
      %19 = dma.hbm_to_vmem [thread:$0]  %s0, 448, %s14, [#allocation3], 32, 32, 2
    $region5: #{tpu_custom_call.1} parent=1 // pred_fallthru
      _
    // Predicated region
    $region6: #{tpu_custom_call.1} parent=1 // pred_check
      _
    $region7: #{tpu_custom_call.1} parent=1 // pred_check_branch
      %21 = sbr.rel (0) target = $region9
    $region8: #{tpu_custom_call.1} parent=1 // pred_region
      %22 = dma.done [#allocation3], 448
    $region9: #{tpu_custom_call.1} parent=1 // pred_fallthru
      _
    %v23 = vld [vmem:[#allocation2] sm:$0x3]
    %v24 = vld [vmem:[#allocation2 + $0x2] sm:$0x3]
    %v25 = vld [vmem:[#allocation2 + $0x4] sm:$0x3]
    %v26 = vld [vmem:[#allocation2 + $0x6] sm:$0x3]
    %v27 = vld [vmem:[#allocation2 + $0x8] sm:$0x3]
    %v28 = vld [vmem:[#allocation2 + $0xa] sm:$0x3]
    %v29 = vld [vmem:[#allocation2 + $0xc] sm:$0x3]
    %v30 = vld [vmem:[#allocation2 + $0xe] sm:$0x3]
    %v31 = vld [vmem:[#allocation2 + $0x10] sm:$0x3]
    %v32 = vld [vmem:[#allocation2 + $0x12] sm:$0x3]
    %v33 = vld [vmem:[#allocation2 + $0x14] sm:$0x3]
    %v34 = vld [vmem:[#allocation2 + $0x16] sm:$0x3]
    %v35 = vld [vmem:[#allocation2 + $0x18] sm:$0x3]
    %v36 = vld [vmem:[#allocation2 + $0x1a] sm:$0x3]
    %v37 = vadd.f32 %v23, %v26
    %v38 = vadd.f32 %v24, %v27
    %v39 = vadd.f32 %v25, %v28
    %v40 = vmul.f32 %v37, %v37
    %v41 = vmul.f32 %v38, %v38
    %v42 = vadd.f32 %v40, %v41
    %v43 = vmul.f32 %v39, %v39
    %v44 = vadd.f32 %v42, %v43
    %v45 = vadd.f32 %v44, 1e-20
    %v46 = vrsqrt.pop %v45
    %v47 = vmul.f32 %v37, %v46
    %v48 = vmul.f32 %v38, %v46
    %v49 = vmul.f32 %v39, %v46
    %v50 = vmul.f32 %v23, %v31
    %v51 = vmul.f32 %v24, %v32
    %v52 = vadd.f32 %v50, %v51
    %v53 = vmul.f32 %v25, %v33
    %v54 = vadd.f32 %v52, %v53
    %v55 = vmax.f32 %v54, 0.0
    %v56 = vmul.f32 %v26, %v31
    %v57 = vmul.f32 %v27, %v32
    %v58 = vadd.f32 %v56, %v57
    %v59 = vmul.f32 %v28, %v33
    %v60 = vadd.f32 %v58, %v59
    %v61 = vmax.f32 %v60, 0.0
    %v62 = vmul.f32 %v26, %v47
    %v63 = vmul.f32 %v27, %v48
    %v64 = vadd.f32 %v62, %v63
    %v65 = vmul.f32 %v28, %v49
    %v66 = vadd.f32 %v64, %v65
    %v67 = vmax.f32 %v66, 0.0
    %v68 = vmul.f32 %v31, %v47
    %v69 = vmul.f32 %v32, %v48
    %v70 = vadd.f32 %v68, %v69
    %v71 = vmul.f32 %v33, %v49
    %v72 = vadd.f32 %v70, %v71
    %v73 = vmax.f32 %v72, 0.0
    %v74 = vmul.f32 %v29, %v29
    %v75 = vmul.f32 %v74, %v74
    %v76 = vmul.f32 %v73, %v73
    %v77 = vsub.f32 %v75, 1.0
    %v78 = vmul.f32 %v76, %v77
    %v79 = vadd.f32 %v78, 1.0
    %v80 = vmul.f32 %v79, 3.1415927
    %v81 = vmul.f32 %v80, %v79
    %v82 = vadd.f32 %v81, 1e-30
    %v83 = vrcp.pop %v82
    %v84 = vmul.f32 %v75, %v83
    %v85 = vmul.f32 %v84, %v73
    %v86 = vmul.f32 %v85, 0.25
    %v87 = vmax.f32 %v67, 0.0001
    %v88 = vrcp.pop %v87
    %v89 = vmul.f32 %v86, %v88
    %v90 = vmul.f32 %v55, 0.31830987
    %v91 = vadd.f32 %v89, %v90
    %v92 = vmul.f32 %v91, 0.5
    %v93 = vmul.f32 %v74, 0.5
    %v94 = vsub.f32 1.0, %v93
    %v95 = vmul.f32 %v61, %v94
    %v96 = vadd.f32 %v95, %v93
    %v97 = vadd.f32 %v96, 1e-30
    %v98 = vrcp.pop %v97
    %v99 = vmul.f32 %v61, %v98
    %v100 = vmul.f32 %v55, %v94
    %v101 = vadd.f32 %v100, %v93
    %v102 = vadd.f32 %v101, 1e-30
    %v103 = vrcp.pop %v102
    %v104 = vmul.f32 %v55, %v103
    %v105 = vmul.f32 %v99, %v104
    %v106 = vmin.f32 %v67, 1.0
    %v107 = vsub.f32 1.0, %v106
    %v108 = vmul.f32 %v107, %v107
    %v109 = vmul.f32 %v108, %v108
    %v110 = vmul.f32 %v109, %v107
    %v111 = vsub.f32 1.0, %v30
    %v112 = vmul.f32 %v111, %v90
    %v113 = vmul.f32 %v84, %v105
    %v114 = vmul.f32 %v55, 0.25
    %v115 = vmul.f32 %v113, %v114
    %v116 = vmul.f32 %v111, 0.04
    %v117 = vmul.f32 %v34, %v30
    %v118 = vadd.f32 %v116, %v117
    %v119 = vsub.f32 1.0, %v118
    %v120 = vmul.f32 %v119, %v110
    %v121 = vadd.f32 %v118, %v120
    %v122 = vmul.f32 %v34, %v112
    %v123 = vmul.f32 %v115, %v121
    %v124 = vadd.f32 %v122, %v123
    %v125 = vmul.f32 %v35, %v30
    %v126 = vadd.f32 %v116, %v125
    %v127 = vsub.f32 1.0, %v126
    %v128 = vmul.f32 %v127, %v110
    %v129 = vadd.f32 %v126, %v128
    %v130 = vmul.f32 %v35, %v112
    %v131 = vmul.f32 %v115, %v129
    %v132 = vadd.f32 %v130, %v131
    %v133 = vmul.f32 %v36, %v30
    %v134 = vadd.f32 %v116, %v133
    %v135 = vsub.f32 1.0, %v134
    %v136 = vmul.f32 %v135, %v110
    %v137 = vadd.f32 %v134, %v136
    %v138 = vmul.f32 %v36, %v112
    %v139 = vmul.f32 %v115, %v137
    %v140 = vadd.f32 %v138, %v139
    %141 = vst [vmem:[#allocation5] sm:$0x3] %v124
    %s142 = scalar_lea.vmem [#allocation5], 2
    %143 = vst [vmem:[%s142] sm:$0x3] %v132
    %s144 = scalar_lea.vmem [#allocation5], 4
    %145 = vst [vmem:[%s144] sm:$0x3] %v140
    %s146 = scalar_lea.vmem [#allocation5], 6
    %147 = vst [vmem:[%s146] sm:$0x3] %v92
    // Predicated region
    $region10: #{tpu_custom_call.1} parent=1 // pred_check
      _
    $region11: #{tpu_custom_call.1} parent=1 // pred_check_branch
      %149 = sbr.rel (0) target = $region13
    $region12: #{tpu_custom_call.1} parent=1 // pred_region
      %s151 = ssub.s32 128, 128
      %152 = vsyncadd [#allocation4], %s151
      %s153 = sshll.u32 [#allocation5], 4
      %s154 = int_to_ptr.vmem [resolvable:$true] %s153
      %159 = dma.vmem_to_hbm [thread:$0]  %s154, 128, %s1, [#allocation4], 32, 32, 2
    $region13: #{tpu_custom_call.1} parent=1 // pred_fallthru
      _
    // Predicated region
    $region14: #{tpu_custom_call.1} parent=1 // pred_check
      _
    $region15: #{tpu_custom_call.1} parent=1 // pred_check_branch
      %161 = sbr.rel (0) target = $region17
    $region16: #{tpu_custom_call.1} parent=1 // pred_region
      %162 = dma.done [#allocation4], 128
    $region17: #{tpu_custom_call.1} parent=1 // pred_fallthru
      _
    %163 = vsyncpa [#allocation3], 1
    %164 = vsyncpa [#allocation4], 1

</llo_original>
